<compile_context>
chip_gen: v7x
topology: tpu7x:2x2x1
jax: 0.10.0
libtpu: 0.0.40
codegen_flags: <defaults>
</compile_context>

<pallas_src>
import functools

import jax
import jax.numpy as jnp
from jax.experimental import pallas as pl
from jax.experimental.pallas import tpu as pltpu


def _round_up(x, m):
    return ((x + m - 1) // m) * m


# -----------------------------------------------------------------------------
# Kernel
# -----------------------------------------------------------------------------
def _actor_kernel(s_ref, p_ref, o_ref, *, in_size, out_size, offs, out_scale):
    r_w1, r_b1 = offs["r_w1"], offs["r_b1"]
    r_w2, r_b2 = offs["r_w2"], offs["r_b2"]
    r_w3, r_b3 = offs["r_w3"], offs["r_b3"]
    h_pad = offs["h_pad"]

    s = s_ref[...]                                          # (bb, in_size)

    # ---- layer 1: K = in_size (tiny) -> VPU broadcast FMAs, skip the MXU ----
    h1 = p_ref[r_b1:r_b1 + 1, :]                            # (1, h_pad) bias row
    for k in range(in_size):                                # unrolled, in_size small
        h1 = h1 + s[:, k:k + 1] * p_ref[r_w1 + k:r_w1 + k + 1, :]
    h1 = jnp.maximum(h1, 0.0)                               # (bb, h_pad)

    # ---- layer 2: lane-dense (h_pad x h_pad) matmul on the MXU ----
    h2 = jnp.dot(h1, p_ref[r_w2:r_w2 + h_pad, :],
                 preferred_element_type=jnp.float32)
    h2 = jnp.maximum(h2 + p_ref[r_b2:r_b2 + 1, :], 0.0)     # (bb, h_pad)

    # ---- layer 3: N = out_size (tiny) -> VPU multiply + lane reduction,
    # assembled into one value and written with a SINGLE full-tile store. ----
    cols = []
    for o in range(out_size):                               # unrolled, out_size small
        w3_row = p_ref[r_w3 + o:r_w3 + o + 1, :]            # (1, h_pad)
        b3_o = p_ref[r_b3:r_b3 + 1, o:o + 1]                # (1, 1)
        cols.append(jnp.sum(h2 * w3_row, axis=-1, keepdims=True) + b3_o)
    pre = cols[0] if out_size == 1 else jnp.concatenate(cols, axis=-1)
    o_ref[...] = (out_scale * jnp.tanh(pre)).astype(o_ref.dtype)


# -----------------------------------------------------------------------------
# Parameter packing: one lane-dense buffer, 8-row aligned sections
# -----------------------------------------------------------------------------
def pack_actor_params(p, input_size, hidden, output_size):
    h_pad = _round_up(hidden, 128)
    # Packing layout assumptions (guard against silent truncation).
    assert hidden <= h_pad
    assert output_size <= h_pad, "b3 is packed into the columns of one row"

    r_w1 = 0
    r_b1 = _round_up(input_size, 8)
    r_w2 = r_b1 + 8
    r_b2 = r_w2 + h_pad
    r_w3 = r_b2 + 8
    r_b3 = r_w3 + _round_up(output_size, 8)
    rows = r_b3 + 8

    buf = jnp.zeros((rows, h_pad), jnp.float32)
    buf = buf.at[r_w1:r_w1 + input_size, :hidden].set(p["w1"])         # (in, hidden)
    buf = buf.at[r_b1, :hidden].set(p["b1"].reshape(-1))
    buf = buf.at[r_w2:r_w2 + hidden, :hidden].set(p["w2"])             # (hidden, hidden)
    buf = buf.at[r_b2, :hidden].set(p["b2"].reshape(-1))
    buf = buf.at[r_w3:r_w3 + output_size, :hidden].set(p["w3"].T)      # (out, hidden)
    buf = buf.at[r_b3, :output_size].set(p["b3"].reshape(-1))

    offs = dict(r_w1=r_w1, r_b1=r_b1, r_w2=r_w2, r_b2=r_b2,
                r_w3=r_w3, r_b3=r_b3, h_pad=h_pad)
    return buf, offs


# -----------------------------------------------------------------------------
# Block-size heuristic
# -----------------------------------------------------------------------------
def _choose_block(batch, max_block_b):
    """Pick (bb, padded_batch).

    * batch <= 128: single block covering the whole batch (no padding).
    * batch  > 128: cap bb at max_block_b (vreg-pressure bound) AND at
      ~half the batch rounded up to 8, so the grid always has >= 2 steps
      (lets v7x's second TensorCore pick up work via "parallel" semantics).
      The batch is padded up to a multiple of bb; padded rows are discarded
      by the wrapper.
    """
    if batch <= 128:
        return batch, batch
    half = _round_up((batch + 1) // 2, 8)
    bb = min(max_block_b, half)
    padded = _round_up(batch, bb)
    return bb, padded


# -----------------------------------------------------------------------------
# Wrapper
# -----------------------------------------------------------------------------
def actor_forward(s, packed, offs, *, input_size, output_size, max_block_b=256):
    """s: (batch, input_size) float32. packed: packed parameter buffer."""
    batch = s.shape[0]
    h_pad = offs["h_pad"]

    bb, padded = _choose_block(batch, max_block_b)
    grid = (padded // bb,)
    s_in = s if padded == batch else jnp.pad(s, ((0, padded - batch), (0, 0)))

    kernel = functools.partial(
        _actor_kernel,
        in_size=input_size,
        out_size=output_size,
        offs=offs,
        out_scale=2.0,
    )

    out_bytes = padded * output_size * 4
    cost = pl.CostEstimate(
        flops=2 * padded * h_pad * h_pad,                    # layer-2 MXU dominates
        transcendentals=padded * output_size,                # tanh
        bytes_accessed=int(packed.size * 4 + s_in.size * 4 + out_bytes),
    )

    out = pl.pallas_call(
        kernel,
        out_shape=jax.ShapeDtypeStruct((padded, output_size), jnp.float32),
        grid=grid,
        in_specs=[
            pl.BlockSpec((bb, input_size), lambda i: (i, 0)),
            pl.BlockSpec(packed.shape, lambda i: (0, 0)),
        ],
        out_specs=pl.BlockSpec((bb, output_size), lambda i: (i, 0)),
        compiler_params=pltpu.CompilerParams(
            dimension_semantics=("parallel",)),
        cost_estimate=cost,
    )(s_in, packed)

    return out if padded == batch else out[:batch]


# -----------------------------------------------------------------------------
# Init + reference
# -----------------------------------------------------------------------------
def init_actor_params(key, input_size, hidden_size, output_size):
    """PyTorch-style uniform(-1/sqrt(fan_in), 1/sqrt(fan_in)) init.

    Weights are stored as (in_features, out_features), i.e. the transpose of
    nn.Linear.weight, so forward computes x @ W directly.
    """
    ks = jax.random.split(key, 6)

    def lin(kw, kb, fan_in, fan_out):
        bound = 1.0 / (fan_in ** 0.5)
        w = jax.random.uniform(kw, (fan_in, fan_out), jnp.float32, -bound, bound)
        b = jax.random.uniform(kb, (1, fan_out), jnp.float32, -bound, bound)
        return w, b

    w1, b1 = lin(ks[0], ks[1], input_size, hidden_size)
    w2, b2 = lin(ks[2], ks[3], hidden_size, hidden_size)
    w3, b3 = lin(ks[4], ks[5], hidden_size, output_size)
    return {"w1": w1, "b1": b1, "w2": w2, "b2": b2, "w3": w3, "b3": b3}


def actor_reference(s, p):
    x = jnp.maximum(s @ p["w1"] + p["b1"], 0.0)
    x = jnp.maximum(x @ p["w2"] + p["b2"], 0.0)
    return 2.0 * jnp.tanh(x @ p["w3"] + p["b3"])


if __name__ == "__main__":
    # Pendulum-v0: observation dim 3, action dim 1; small synthetic sizes.
    input_size, hidden_size, output_size = 3, 32, 1

    key = jax.random.PRNGKey(0)
    k_params, k_s1, k_s2 = jax.random.split(key, 3)
    params = init_actor_params(k_params, input_size, hidden_size, output_size)
    packed, offs = pack_actor_params(params, input_size, hidden_size, output_size)

    # Small-batch path (single grid step).
    batch = 8
    s = jax.random.normal(k_s1, (batch, input_size), jnp.float32)
    out = actor_forward(s, packed, offs,
                        input_size=input_size, output_size=output_size)
    jax.block_until_ready(out)
    ref = actor_reference(s, params)
    assert out.shape == (batch, output_size)
    assert jnp.allclose(out, ref, atol=1e-5, rtol=1e-5), \
        float(jnp.max(jnp.abs(out - ref)))

    # Tiled path (ragged batch -> wrapper padding, grid >= 2).
    batch2 = 300
    s2 = jax.random.normal(k_s2, (batch2, input_size), jnp.float32)
    out2 = actor_forward(s2, packed, offs,
                         input_size=input_size, output_size=output_size)
    jax.block_until_ready(out2)
    ref2 = actor_reference(s2, params)
    assert out2.shape == (batch2, output_size)
    assert jnp.allclose(out2, ref2, atol=1e-5, rtol=1e-5), \
        float(jnp.max(jnp.abs(out2 - ref2)))

    print("KERNEL_OK")
</pallas_src>

<mosaic_0001>
module attributes {stable_mosaic.version = 11 : i64} {
  func.func @_actor_kernel(%arg0: i32, %arg1: memref<8x3xf32, #tpu.memory_space<vmem>>, %arg2: memref<168x128xf32, #tpu.memory_space<vmem>>, %arg3: memref<8x1xf32, #tpu.memory_space<vmem>>) attributes {dimension_semantics = [#tpu.dimension_semantics<parallel>], iteration_bounds = array<i64: 1>, scalar_prefetch = 0 : i64, scratch_operands = 0 : i64, tpu.core_type = #tpu.core_type<tc>, window_params = [{transform_indices = @transform_0, window_bounds = array<i64: 8, 3>}, {pipeline_mode = #tpu.pipeline_mode<synchronous>, transform_indices = @transform_1, window_bounds = array<i64: 168, 128>}, {transform_indices = @transform_2, window_bounds = array<i64: 8, 1>}]} {
    %c0 = arith.constant 0 : index
    %c0_0 = arith.constant 0 : index
    %0 = vector.load %arg1[%c0, %c0_0] : memref<8x3xf32, #tpu.memory_space<vmem>>, vector<8x3xf32>
    %c8 = arith.constant 8 : index
    %c0_1 = arith.constant 0 : index
    %1 = vector.load %arg2[%c8, %c0_1] : memref<168x128xf32, #tpu.memory_space<vmem>>, vector<1x128xf32>
    %2 = vector.extract_strided_slice %0 {offsets = [0, 0], sizes = [8, 1], strides = [1, 1]} : vector<8x3xf32> to vector<8x1xf32>
    %c0_2 = arith.constant 0 : index
    %c0_3 = arith.constant 0 : index
    %3 = vector.load %arg2[%c0_2, %c0_3] : memref<168x128xf32, #tpu.memory_space<vmem>>, vector<1x128xf32>
    %4 = vector.broadcast %2 : vector<8x1xf32> to vector<8x128xf32>
    %5 = vector.broadcast %3 : vector<1x128xf32> to vector<8x128xf32>
    %6 = arith.mulf %4, %5 : vector<8x128xf32>
    %7 = vector.broadcast %1 : vector<1x128xf32> to vector<8x128xf32>
    %8 = arith.addf %7, %6 : vector<8x128xf32>
    %9 = vector.extract_strided_slice %0 {offsets = [0, 1], sizes = [8, 1], strides = [1, 1]} : vector<8x3xf32> to vector<8x1xf32>
    %c1 = arith.constant 1 : index
    %c0_4 = arith.constant 0 : index
    %10 = vector.load %arg2[%c1, %c0_4] : memref<168x128xf32, #tpu.memory_space<vmem>>, vector<1x128xf32>
    %11 = vector.broadcast %9 : vector<8x1xf32> to vector<8x128xf32>
    %12 = vector.broadcast %10 : vector<1x128xf32> to vector<8x128xf32>
    %13 = arith.mulf %11, %12 : vector<8x128xf32>
    %14 = arith.addf %8, %13 : vector<8x128xf32>
    %15 = vector.extract_strided_slice %0 {offsets = [0, 2], sizes = [8, 1], strides = [1, 1]} : vector<8x3xf32> to vector<8x1xf32>
    %c2 = arith.constant 2 : index
    %c0_5 = arith.constant 0 : index
    %16 = vector.load %arg2[%c2, %c0_5] : memref<168x128xf32, #tpu.memory_space<vmem>>, vector<1x128xf32>
    %17 = vector.broadcast %15 : vector<8x1xf32> to vector<8x128xf32>
    %18 = vector.broadcast %16 : vector<1x128xf32> to vector<8x128xf32>
    %19 = arith.mulf %17, %18 : vector<8x128xf32>
    %20 = arith.addf %14, %19 : vector<8x128xf32>
    %cst = arith.constant 0.000000e+00 : f32
    %21 = vector.broadcast %cst : f32 to vector<8x128xf32>
    %22 = arith.maximumf %20, %21 : vector<8x128xf32>
    %c16 = arith.constant 16 : index
    %c0_6 = arith.constant 0 : index
    %23 = vector.load %arg2[%c16, %c0_6] : memref<168x128xf32, #tpu.memory_space<vmem>>, vector<128x128xf32>
    %cst_7 = arith.constant dense<0.000000e+00> : vector<8x128xf32>
    %24 = tpu.matmul %22, %23, %cst_7 {dimension_numbers = #tpu.dot_dimension_numbers<[1], [0], [0], [1], [0, 0, 1, 1], [], []>} : vector<8x128xf32>, vector<128x128xf32>, vector<8x128xf32> -> vector<8x128xf32>
    %c144 = arith.constant 144 : index
    %c0_8 = arith.constant 0 : index
    %25 = vector.load %arg2[%c144, %c0_8] : memref<168x128xf32, #tpu.memory_space<vmem>>, vector<1x128xf32>
    %26 = vector.broadcast %25 : vector<1x128xf32> to vector<8x128xf32>
    %27 = arith.addf %24, %26 : vector<8x128xf32>
    %cst_9 = arith.constant 0.000000e+00 : f32
    %28 = vector.broadcast %cst_9 : f32 to vector<8x128xf32>
    %29 = arith.maximumf %27, %28 : vector<8x128xf32>
    %c152 = arith.constant 152 : index
    %c0_10 = arith.constant 0 : index
    %30 = vector.load %arg2[%c152, %c0_10] : memref<168x128xf32, #tpu.memory_space<vmem>>, vector<1x128xf32>
    %c160 = arith.constant 160 : index
    %c0_11 = arith.constant 0 : index
    %31 = vector.load %arg2[%c160, %c0_11] : memref<168x128xf32, #tpu.memory_space<vmem>>, vector<1x1xf32>
    %32 = vector.broadcast %30 : vector<1x128xf32> to vector<8x128xf32>
    %33 = arith.mulf %29, %32 : vector<8x128xf32>
    %cst_12 = arith.constant dense<0.000000e+00> : vector<8xf32>
    %34 = vector.multi_reduction <add>, %33, %cst_12 [1] : vector<8x128xf32> to vector<8xf32>
    %35 = vector.shape_cast %34 : vector<8xf32> to vector<8x1xf32>
    %36 = vector.broadcast %31 : vector<1x1xf32> to vector<8x1xf32>
    %37 = arith.addf %35, %36 : vector<8x1xf32>
    %38 = math.tanh %37 : vector<8x1xf32>
    %cst_13 = arith.constant 2.000000e+00 : f32
    %39 = vector.broadcast %cst_13 : f32 to vector<8x1xf32>
    %40 = arith.mulf %39, %38 : vector<8x1xf32>
    %c0_14 = arith.constant 0 : index
    %c0_15 = arith.constant 0 : index
    %41 = vector.load %arg3[%c0_14, %c0_15] : memref<8x1xf32, #tpu.memory_space<vmem>>, vector<8x1xf32>
    tpu.vector_store %arg3[%c0_14, %c0_15], %40 {strides = array<i32>} : memref<8x1xf32, #tpu.memory_space<vmem>>, vector<8x1xf32>,
    return
  }
  func.func @transform_0(%arg0: i32) -> (i32, i32) {
    %c0_i32 = arith.constant 0 : i32
    %c0_i32_0 = arith.constant 0 : i32
    return %arg0, %c0_i32 : i32, i32
  }
  func.func @transform_1(%arg0: i32) -> (i32, i32) {
    %c0_i32 = arith.constant 0 : i32
    %c0_i32_0 = arith.constant 0 : i32
    %c0_i32_1 = arith.constant 0 : i32
    return %c0_i32, %c0_i32_0 : i32, i32
  }
  func.func @transform_2(%arg0: i32) -> (i32, i32) {
    %c0_i32 = arith.constant 0 : i32
    %c0_i32_0 = arith.constant 0 : i32
    return %arg0, %c0_i32 : i32, i32
  }
}

</mosaic_0001>

<llo_original>
// kernel: tpu_custom_call.1
$region0: #{tpu_custom_call.1}
  #allocation0 [shape = 'u32[]', space=smem, size = 0x4, offset = 0x4, fixed_abs, tag = 'smem constant byte address 0x4 - core index']
  #allocation1 [shape = 'u32[144,128]{1,0:T(1,128)}', space=vmem, size = 0x12000, scoped, tag = 'internal scratch']
  %s0 = inlined_call_operand.vmem [shape: f32[8,3], index: 0, kind: input, shape index: {}]
  %s1 = inlined_call_operand.hbm [shape: f32[168,128], index: 1, kind: input, shape index: {}]
  %s2 = inlined_call_operand.vmem [shape: f32[8,1], index: 2, kind: output, shape index: {}]
  %s3 = sld [smem:[#allocation0]]
  $region22: #{tpu_custom_call.1} parent=0
    _
  %s5 = ssub.s32 1, %s3
  %s6 = scalar_select 0, %s5, %s3
  $region1: #{tpu_custom_call.1} parent=0
    #allocation2 [shape = 'u8[86016]{0}', space=vmem, size = 0x15000, scoped, tag = 'input window, operand 1, single buffered']
    #allocation3 [shape = 's32[1]{0}', space=sflag, size = 0x4, scoped, tag = 'scoped memory for tpu_custom_call.1']
    %7 = vsyncpa [#allocation3], 0
    // Predicated region
    $region2: #{tpu_custom_call.1} parent=1 // pred_check
      _
    $region3: #{tpu_custom_call.1} parent=1 // pred_check_branch
      %9 = sbr.rel (0) target = $region5
    $region4: #{tpu_custom_call.1} parent=1 // pred_region
      _
    $region5: #{tpu_custom_call.1} parent=1 // pred_fallthru
      _
    // Predicated region
    $region6: #{tpu_custom_call.1} parent=1 // pred_check
      _
    $region7: #{tpu_custom_call.1} parent=1 // pred_check_branch
      %11 = sbr.rel (0) target = $region9
    $region8: #{tpu_custom_call.1} parent=1 // pred_region
      %s13 = ssub.s32 2688, 2688
      %14 = vsyncadd [#allocation3], %s13
      %s15 = sshll.u32 [#allocation2], 4
      %s16 = int_to_ptr.vmem [resolvable:$true] %s15
      %21 = dma.hbm_to_vmem [thread:$0]  %s1, 2688, %s16, [#allocation3], 128, 128, 8
    $region9: #{tpu_custom_call.1} parent=1 // pred_fallthru
      _
    // Predicated region
    $region10: #{tpu_custom_call.1} parent=1 // pred_check
      _
    $region11: #{tpu_custom_call.1} parent=1 // pred_check_branch
      %23 = sbr.rel (0) target = $region13
    $region12: #{tpu_custom_call.1} parent=1 // pred_region
      %24 = dma.done [#allocation3], 2688
    $region13: #{tpu_custom_call.1} parent=1 // pred_fallthru
      _
    %v25 = vld [vmem:[%s0] sm:$0xff]
    %v26 = vld [vmem:[#allocation2 + $0x8] sm:$0x1]
    %v27 = vld [vmem:[#allocation2] sm:$0x1]
    %29 = vset.pattern.permute.xlu0 0
    %30 = vperm.xlu0 %29, %v25
    %v31 = vpop.permute.xlu0 %30
    %v33 = vlaneseq
    %v34 = vshrl.u32 %v33, 7
    %v35 = vsub.s32 0, %v34
    %v36 = vrot.slane %v27, %v35
    %v37 = vmul.f32 %v31, %v36
    %v38 = vlaneseq
    %v39 = vshrl.u32 %v38, 7
    %v40 = vsub.s32 0, %v39
    %v41 = vrot.slane %v26, %v40
    %v42 = vadd.f32 %v41, %v37
    %v43 = vld [vmem:[#allocation2 + $0x1] sm:$0x1]
    %44 = vset.pattern.permute.xlu0 1
    %45 = vperm.xlu0 %44, %v25
    %v46 = vpop.permute.xlu0 %45
    %v48 = vlaneseq
    %v49 = vshrl.u32 %v48, 7
    %v50 = vsub.s32 0, %v49
    %v51 = vrot.slane %v43, %v50
    %v52 = vmul.f32 %v46, %v51
    %v53 = vadd.f32 %v42, %v52
    %v54 = vld [vmem:[#allocation2 + $0x2] sm:$0x1]
    %55 = vset.pattern.permute.xlu0 2
    %56 = vperm.xlu0 %55, %v25
    %v57 = vpop.permute.xlu0 %56
    %v59 = vlaneseq
    %v60 = vshrl.u32 %v59, 7
    %v61 = vsub.s32 0, %v60
    %v62 = vrot.slane %v54, %v61
    %v63 = vmul.f32 %v57, %v62
    %v64 = vadd.f32 %v53, %v63
    %v65 = vmax.f32 %v64, 0.0
    %v66 = vld [vmem:[#allocation2 + $0x10] sm:$0xff]
    %v67 = vld [vmem:[#allocation2 + $0x18] sm:$0xff]
    %v68 = vld [vmem:[#allocation2 + $0x20] sm:$0xff]
    %v69 = vld [vmem:[#allocation2 + $0x28] sm:$0xff]
    %v70 = vld [vmem:[#allocation2 + $0x30] sm:$0xff]
    %v71 = vld [vmem:[#allocation2 + $0x38] sm:$0xff]
    %v72 = vld [vmem:[#allocation2 + $0x40] sm:$0xff]
    %v73 = vld [vmem:[#allocation2 + $0x48] sm:$0xff]
    %v74 = vld [vmem:[#allocation2 + $0x50] sm:$0xff]
    %v75 = vld [vmem:[#allocation2 + $0x58] sm:$0xff]
    %v76 = vld [vmem:[#allocation2 + $0x60] sm:$0xff]
    %v77 = vld [vmem:[#allocation2 + $0x68] sm:$0xff]
    %v78 = vld [vmem:[#allocation2 + $0x70] sm:$0xff]
    %v79 = vld [vmem:[#allocation2 + $0x78] sm:$0xff]
    %v80 = vld [vmem:[#allocation2 + $0x80] sm:$0xff]
    %v81 = vld [vmem:[#allocation2 + $0x88] sm:$0xff]
    %v82 = vld [vmem:[#allocation2 + $0x90] sm:$0x1]
    %v83 = vlaneseq
    %v84 = vshrl.u32 %v83, 7
    %v85 = vsub.s32 0, %v84
    %v86 = vrot.slane %v82, %v85
    %87 = vmatprep.subr.mxu0 0.0
    %88 = vmatpush1.msra.mxu0 %v66
    %89 = vmatprep.subr.mxu0 0.0
    %90 = vmatpush1.msra.mxu0 %v67
    %91 = vmatprep.subr.mxu0 0.0
    %92 = vmatpush1.msra.mxu0 %v68
    %93 = vmatprep.subr.mxu0 0.0
    %94 = vmatpush1.msra.mxu0 %v69
    %95 = vmatprep.subr.mxu0 0.0
    %96 = vmatpush1.msra.mxu0 %v70
    %97 = vmatprep.subr.mxu0 0.0
    %98 = vmatpush1.msra.mxu0 %v71
    %99 = vmatprep.subr.mxu0 0.0
    %100 = vmatpush1.msra.mxu0 %v72
    %101 = vmatprep.subr.mxu0 0.0
    %102 = vmatpush1.msra.mxu0 %v73
    %103 = vmatprep.subr.mxu0 0.0
    %104 = vmatpush1.msra.mxu0 %v74
    %105 = vmatprep.subr.mxu0 0.0
    %106 = vmatpush1.msra.mxu0 %v75
    %107 = vmatprep.subr.mxu0 0.0
    %108 = vmatpush1.msra.mxu0 %v76
    %109 = vmatprep.subr.mxu0 0.0
    %110 = vmatpush1.msra.mxu0 %v77
    %111 = vmatprep.subr.mxu0 0.0
    %112 = vmatpush1.msra.mxu0 %v78
    %113 = vmatprep.subr.mxu0 0.0
    %114 = vmatpush1.msra.mxu0 %v79
    %115 = vmatprep.subr.mxu0 0.0
    %116 = vmatpush1.msra.mxu0 %v80
    %117 = vmatprep.subr.mxu0 0.0
    %118 = vmatpush1.msra.mxu0 %v81
    %119 = vmatprep.subr.mxu0 0.0
    %120 = vmatpush1.msra.mxu0 0.0
    %121 = vmatprep.subr.mxu0 0.0
    %122 = vmatpush1.msra.mxu0 0.0
    %123 = vmatprep.subr.mxu0 0.0
    %124 = vmatpush1.msra.mxu0 0.0
    %125 = vmatprep.subr.mxu0 0.0
    %126 = vmatpush1.msra.mxu0 0.0
    %127 = vmatprep.subr.mxu0 0.0
    %128 = vmatpush1.msra.mxu0 0.0
    %129 = vmatprep.subr.mxu0 0.0
    %130 = vmatpush1.msra.mxu0 0.0
    %131 = vmatprep.subr.mxu0 0.0
    %132 = vmatpush1.msra.mxu0 0.0
    %133 = vmatprep.subr.mxu0 0.0
    %134 = vmatpush1.msra.mxu0 0.0
    %135 = vmatprep.subr.mxu0 0.0
    %136 = vmatpush1.msra.mxu0 0.0
    %137 = vmatprep.subr.mxu0 0.0
    %138 = vmatpush1.msra.mxu0 0.0
    %139 = vmatprep.subr.mxu0 0.0
    %140 = vmatpush1.msra.mxu0 0.0
    %141 = vmatprep.subr.mxu0 0.0
    %142 = vmatpush1.msra.mxu0 0.0
    %143 = vmatprep.subr.mxu0 0.0
    %144 = vmatpush1.msra.mxu0 0.0
    %145 = vmatprep.subr.mxu0 0.0
    %146 = vmatpush1.msra.mxu0 0.0
    %147 = vmatprep.subr.mxu0 0.0
    %148 = vmatpush1.msra.mxu0 0.0
    %149 = vmatprep.subr.mxu0 0.0
    %150 = vmatpush1.msra.mxu0 0.0
    %151 = vmatprep.mubr.f32.mxu0 0.0
    %152 = vmatmul.mubr.f32.gmra.mrb[0].mxu0 %v65
    %v153 = vpop.f32.mrb[0].mxu0
    %v154 = vadd.f32 %v86, %v153
    %v155 = vpop.f32.mrb[0].mxu0
    %156 = vdwg.mxu0
    %v157 = vmax.f32 %v154, 0.0
    %v158 = vld [vmem:[#allocation2 + $0x98] sm:$0x1]
    %v159 = vld [vmem:[#allocation2 + $0xa0] sm:$0x1]
    %v160 = vlaneseq
    %v161 = vshrl.u32 %v160, 7
    %v162 = vsub.s32 0, %v161
    %v163 = vrot.slane %v158, %v162
    %v164 = vmul.f32 %v157, %v163
    %165 = vadd.xlane.f32.xlu0 %v164
    %v166 = vpop.xlane.xlu0 %165
    %v167 = vlaneseq
    %v168 = vshrl.u32 %v167, 7
    %v169 = vsub.s32 0, %v168
    %v170 = vrot.slane %v159, %v169
    %v171 = vadd.f32 %v166, %v170
    %v172 = vtanh.pop %v171
    %v173 = vmul.f32 %v172, 2.0
    %vm174 = vcmask 7168
    %175 = vst.msk [vmem:[%s2] sm:$0xff] %vm174, %v173
    // Predicated region
    $region14: #{tpu_custom_call.1} parent=1 // pred_check
      _
    $region15: #{tpu_custom_call.1} parent=1 // pred_check_branch
      %177 = sbr.rel (0) target = $region17
    $region16: #{tpu_custom_call.1} parent=1 // pred_region
      _
    $region17: #{tpu_custom_call.1} parent=1 // pred_fallthru
      _
    // Predicated region
    $region18: #{tpu_custom_call.1} parent=1 // pred_check
      _
    $region19: #{tpu_custom_call.1} parent=1 // pred_check_branch
      %179 = sbr.rel (0) target = $region21
    $region20: #{tpu_custom_call.1} parent=1 // pred_region
      _
    $region21: #{tpu_custom_call.1} parent=1 // pred_fallthru
      _
    %180 = vsyncpa [#allocation3], 1

</llo_original>
